<compile_context>
chip_gen: v5e
topology: v5e:2x2
jax: 0.10.0
libtpu: 0.0.40
codegen_flags: <defaults>
</compile_context>

<pallas_src>
import jax
import jax.numpy as jnp
from jax.experimental import pallas as pl
from jax.experimental.pallas import tpu as pltpu


def _round_up(a, m):
    return ((a + m - 1) // m) * m


def _net_kernel(x_ref, w1_ref, w2_ref, o_ref):
    # fc1: (tm, in) @ (in, h_pad) on the MXU.  Cast x f32->bf16 on the VPU here
    # (hidden under the matmul) so the HBM->VMEM DMA of x is a single f32 pass.
    x = x_ref[...].astype(jnp.bfloat16)
    z1 = jnp.dot(x, w1_ref[...], preferred_element_type=jnp.float32)
    # Sigmoid in f32 (v5e VPU/EUP have no bf16), then feed fc2 as a value —
    # the intermediate never touches HBM and never round-trips a VMEM scratch.
    h = jax.nn.sigmoid(z1).astype(jnp.bfloat16)
    # fc2: (tm, h_pad) @ (h_pad, n_pad) on the MXU, f32 accumulation.
    z2 = jnp.dot(h, w2_ref[...], preferred_element_type=jnp.float32)
    o_ref[...] = jax.nn.sigmoid(z2).astype(o_ref.dtype)


def _make_call(b_pad, tm, in_size, h_pad, n_pad, vmem_limit, weight_pipeline_mode):
    if weight_pipeline_mode is None:
        w1_spec = pl.BlockSpec((in_size, h_pad), lambda i: (0, 0))
        w2_spec = pl.BlockSpec((h_pad, n_pad), lambda i: (0, 0))
    else:
        # Grid-invariant index_map -> single-buffer the resident weights.
        w1_spec = pl.BlockSpec((in_size, h_pad), lambda i: (0, 0),
                               pipeline_mode=weight_pipeline_mode)
        w2_spec = pl.BlockSpec((h_pad, n_pad), lambda i: (0, 0),
                               pipeline_mode=weight_pipeline_mode)
    return pl.pallas_call(
        _net_kernel,
        out_shape=jax.ShapeDtypeStruct((b_pad, n_pad), jnp.bfloat16),
        grid_spec=pltpu.PrefetchScalarGridSpec(
            num_scalar_prefetch=0,
            grid=(b_pad // tm,),
            in_specs=[
                # x streamed over the batch grid (auto double-buffered).
                pl.BlockSpec((tm, in_size), lambda i: (i, 0)),
                # Weights resident in VMEM across all grid steps.
                w1_spec,
                w2_spec,
            ],
            out_specs=pl.BlockSpec((tm, n_pad), lambda i: (i, 0)),
        ),
        compiler_params=pltpu.CompilerParams(
            dimension_semantics=("parallel",),
            vmem_limit_bytes=vmem_limit,
        ),
    )


def net_forward(x, w1, w2, *, tm=256):
    """sigmoid(sigmoid(x @ w1.T) @ w2.T) in a single fused Pallas kernel."""
    batch, in_size = x.shape
    hidden = w1.shape[0]
    out_size = w2.shape[0]
    assert w1.shape == (hidden, in_size)
    assert w2.shape == (out_size, hidden)

    # Lane-dense padding for hidden / output dims (full-lane vst, no vst.msk).
    h_pad = _round_up(hidden, 128)
    n_pad = _round_up(out_size, 128)

    # Batch tile: big enough to amortize ~0.35 us/grid-step, but never waste
    # more than ~25% of the rows on padding.
    tm = min(_round_up(tm, 8), _round_up(batch, 8))
    while tm > 8 and (_round_up(batch, tm) - batch) * 4 > _round_up(batch, tm):
        tm = _round_up(tm // 2, 8)
    b_pad = _round_up(batch, tm)

    # x: pad batch rows only, keep f32 at the boundary (bf16 cast is in-kernel).
    xb = jnp.pad(x, ((0, b_pad - batch), (0, 0))).astype(jnp.float32)
    # Weights: pad, cast to bf16 and pre-transpose ONCE so the kernel is plain
    # (M,K)@(K,N).  Zero padding is exact: padded w1 rows give sigmoid(0)=0.5
    # hidden columns that multiply zero columns of padded w2.
    # TODO(synk): cache prepared (padded/bf16/transposed) weights across calls.
    w1t = jnp.pad(w1, ((0, h_pad - hidden), (0, 0))).astype(jnp.bfloat16).T          # (in, h_pad)
    w2t = jnp.pad(w2, ((0, n_pad - out_size), (0, h_pad - hidden))).astype(jnp.bfloat16).T  # (h_pad, n_pad)

    # Explicit VMEM budget: resident bf16 weights (single-buffered) +
    # double-buffered x/out tiles + headroom; clamped to v7x's 64 MiB ceiling.
    resident = (in_size * h_pad + h_pad * n_pad) * 2          # bf16 weights
    streamed = 2 * tm * in_size * 4 + 2 * tm * n_pad * 2      # f32 x, bf16 out
    vmem_limit = int(min(max(resident + streamed + (8 << 20), 32 << 20), 64 << 20))
    # TODO(synk): K-tiled fallback (grid over in/hidden with pl.when-init
    # accumulator) when resident bf16 weights exceed the v7x 64 MiB budget.

    out = None
    for mode in (pl.Buffered(1), None):
        try:
            call = _make_call(b_pad, tm, in_size, h_pad, n_pad, vmem_limit, mode)
            out = call(xb, w1t, w2t)
            break
        except Exception:
            if mode is None:
                raise
    return out[:batch, :out_size].astype(jnp.float32)


if __name__ == "__main__":
    # Small shapes consistent with the module: Linear(input, hidden), Linear(hidden, output)
    batch, input_size, hidden_size, output_size = 8, 16, 32, 8

    key = jax.random.PRNGKey(0)
    kx, k1, k2 = jax.random.split(key, 3)
    x = jax.random.normal(kx, (batch, input_size), dtype=jnp.float32)
    w1 = jax.random.normal(k1, (hidden_size, input_size), dtype=jnp.float32) * 0.1
    w2 = jax.random.normal(k2, (output_size, hidden_size), dtype=jnp.float32) * 0.1

    out = net_forward(x, w1, w2)
    jax.block_until_ready(out)

    # Pure-JAX f32 reference (same math as the PyTorch forward with zero bias).
    ref = jax.nn.sigmoid(jax.nn.sigmoid(x @ w1.T) @ w2.T)
    assert out.shape == (batch, output_size)
    # Loose tolerance accounts for bf16 weights/activations (f32 accumulation).
    assert jnp.allclose(out, ref, atol=2e-2, rtol=2e-2), \
        f"max err {jnp.max(jnp.abs(out - ref))}"

    print("KERNEL_OK")
</pallas_src>

<mosaic_0001>
module attributes {stable_mosaic.version = 11 : i64} {
  func.func @_net_kernel(%arg0: i32, %arg1: memref<8x16xf32, #tpu.memory_space<vmem>>, %arg2: memref<16x128xbf16, #tpu.memory_space<vmem>>, %arg3: memref<128x128xbf16, #tpu.memory_space<vmem>>, %arg4: memref<8x128xbf16, #tpu.memory_space<vmem>>) attributes {dimension_semantics = [#tpu.dimension_semantics<parallel>], iteration_bounds = array<i64: 1>, scalar_prefetch = 0 : i64, scratch_operands = 0 : i64, tpu.core_type = #tpu.core_type<tc>, window_params = [{transform_indices = @transform_0, window_bounds = array<i64: 8, 16>}, {pipeline_mode = #tpu.pipeline_mode<synchronous>, transform_indices = @transform_1, window_bounds = array<i64: 16, 128>}, {pipeline_mode = #tpu.pipeline_mode<synchronous>, transform_indices = @transform_2, window_bounds = array<i64: 128, 128>}, {transform_indices = @transform_3, window_bounds = array<i64: 8, 128>}]} {
    %c0 = arith.constant 0 : index
    %c0_0 = arith.constant 0 : index
    %0 = vector.load %arg1[%c0, %c0_0] : memref<8x16xf32, #tpu.memory_space<vmem>>, vector<8x16xf32>
    %1 = arith.truncf %0 : vector<8x16xf32> to vector<8x16xbf16>
    %c0_1 = arith.constant 0 : index
    %c0_2 = arith.constant 0 : index
    %2 = vector.load %arg2[%c0_1, %c0_2] : memref<16x128xbf16, #tpu.memory_space<vmem>>, vector<16x128xbf16>
    %cst = arith.constant dense<0.000000e+00> : vector<8x128xf32>
    %3 = tpu.matmul %1, %2, %cst {dimension_numbers = #tpu.dot_dimension_numbers<[1], [0], [0], [1], [0, 0, 1, 1], [], []>} : vector<8x16xbf16>, vector<16x128xbf16>, vector<8x128xf32> -> vector<8x128xf32>
    %4 = arith.negf %3 : vector<8x128xf32>
    %5 = math.exp %4 : vector<8x128xf32>
    %cst_3 = arith.constant 1.000000e+00 : f32
    %6 = vector.broadcast %cst_3 : f32 to vector<8x128xf32>
    %7 = arith.addf %6, %5 : vector<8x128xf32>
    %8 = arith.divf %6, %7 : vector<8x128xf32>
    %9 = arith.truncf %8 : vector<8x128xf32> to vector<8x128xbf16>
    %c0_4 = arith.constant 0 : index
    %c0_5 = arith.constant 0 : index
    %10 = vector.load %arg3[%c0_4, %c0_5] : memref<128x128xbf16, #tpu.memory_space<vmem>>, vector<128x128xbf16>
    %cst_6 = arith.constant dense<0.000000e+00> : vector<8x128xf32>
    %11 = tpu.matmul %9, %10, %cst_6 {dimension_numbers = #tpu.dot_dimension_numbers<[1], [0], [0], [1], [0, 0, 1, 1], [], []>} : vector<8x128xbf16>, vector<128x128xbf16>, vector<8x128xf32> -> vector<8x128xf32>
    %12 = arith.negf %11 : vector<8x128xf32>
    %13 = math.exp %12 : vector<8x128xf32>
    %cst_7 = arith.constant 1.000000e+00 : f32
    %14 = vector.broadcast %cst_7 : f32 to vector<8x128xf32>
    %15 = arith.addf %14, %13 : vector<8x128xf32>
    %16 = arith.divf %14, %15 : vector<8x128xf32>
    %17 = arith.truncf %16 : vector<8x128xf32> to vector<8x128xbf16>
    %c0_8 = arith.constant 0 : index
    %c0_9 = arith.constant 0 : index
    %18 = vector.load %arg4[%c0_8, %c0_9] : memref<8x128xbf16, #tpu.memory_space<vmem>>, vector<8x128xbf16>
    tpu.vector_store %arg4[%c0_8, %c0_9], %17 {strides = array<i32>} : memref<8x128xbf16, #tpu.memory_space<vmem>>, vector<8x128xbf16>,
    return
  }
  func.func @transform_0(%arg0: i32) -> (i32, i32) {
    %c0_i32 = arith.constant 0 : i32
    %c0_i32_0 = arith.constant 0 : i32
    return %arg0, %c0_i32 : i32, i32
  }
  func.func @transform_1(%arg0: i32) -> (i32, i32) {
    %c0_i32 = arith.constant 0 : i32
    %c0_i32_0 = arith.constant 0 : i32
    %c0_i32_1 = arith.constant 0 : i32
    return %c0_i32, %c0_i32_0 : i32, i32
  }
  func.func @transform_2(%arg0: i32) -> (i32, i32) {
    %c0_i32 = arith.constant 0 : i32
    %c0_i32_0 = arith.constant 0 : i32
    %c0_i32_1 = arith.constant 0 : i32
    return %c0_i32, %c0_i32_0 : i32, i32
  }
  func.func @transform_3(%arg0: i32) -> (i32, i32) {
    %c0_i32 = arith.constant 0 : i32
    %c0_i32_0 = arith.constant 0 : i32
    return %arg0, %c0_i32 : i32, i32
  }
}

module attributes {stable_mosaic.version = 11 : i64} {
  func.func @_net_kernel(%arg0: i32, %arg1: memref<8x16xf32, #tpu.memory_space<vmem>>, %arg2: memref<16x128xbf16, #tpu.memory_space<vmem>>, %arg3: memref<128x128xbf16, #tpu.memory_space<vmem>>, %arg4: memref<8x128xbf16, #tpu.memory_space<vmem>>) attributes {dimension_semantics = [#tpu.dimension_semantics<parallel>], iteration_bounds = array<i64: 1>, scalar_prefetch = 0 : i64, scratch_operands = 0 : i64, tpu.core_type = #tpu.core_type<tc>, window_params = [{transform_indices = @transform_0, window_bounds = array<i64: 8, 16>}, {pipeline_mode = #tpu.pipeline_mode<synchronous>, transform_indices = @transform_1, window_bounds = array<i64: 16, 128>}, {pipeline_mode = #tpu.pipeline_mode<synchronous>, transform_indices = @transform_2, window_bounds = array<i64: 128, 128>}, {transform_indices = @transform_3, window_bounds = array<i64: 8, 128>}]} {
    %c0 = arith.constant 0 : index
    %c0_0 = arith.constant 0 : index
    %0 = vector.load %arg1[%c0, %c0_0] : memref<8x16xf32, #tpu.memory_space<vmem>>, vector<8x16xf32>
    %1 = arith.truncf %0 : vector<8x16xf32> to vector<8x16xbf16>
    %c0_1 = arith.constant 0 : index
    %c0_2 = arith.constant 0 : index
    %2 = vector.load %arg2[%c0_1, %c0_2] : memref<16x128xbf16, #tpu.memory_space<vmem>>, vector<16x128xbf16>
    %cst = arith.constant dense<0.000000e+00> : vector<8x128xf32>
    %3 = tpu.matmul %1, %2, %cst {dimension_numbers = #tpu.dot_dimension_numbers<[1], [0], [0], [1], [0, 0, 1, 1], [], []>} : vector<8x16xbf16>, vector<16x128xbf16>, vector<8x128xf32> -> vector<8x128xf32>
    %4 = arith.negf %3 : vector<8x128xf32>
    %5 = math.exp %4 : vector<8x128xf32>
    %cst_3 = arith.constant 1.000000e+00 : f32
    %6 = vector.broadcast %cst_3 : f32 to vector<8x128xf32>
    %7 = arith.addf %6, %5 : vector<8x128xf32>
    %8 = arith.divf %6, %7 : vector<8x128xf32>
    %9 = arith.truncf %8 : vector<8x128xf32> to vector<8x128xbf16>
    %c0_4 = arith.constant 0 : index
    %c0_5 = arith.constant 0 : index
    %10 = vector.load %arg3[%c0_4, %c0_5] : memref<128x128xbf16, #tpu.memory_space<vmem>>, vector<128x128xbf16>
    %cst_6 = arith.constant dense<0.000000e+00> : vector<8x128xf32>
    %11 = tpu.matmul %9, %10, %cst_6 {dimension_numbers = #tpu.dot_dimension_numbers<[1], [0], [0], [1], [0, 0, 1, 1], [], []>} : vector<8x128xbf16>, vector<128x128xbf16>, vector<8x128xf32> -> vector<8x128xf32>
    %12 = arith.negf %11 : vector<8x128xf32>
    %13 = math.exp %12 : vector<8x128xf32>
    %cst_7 = arith.constant 1.000000e+00 : f32
    %14 = vector.broadcast %cst_7 : f32 to vector<8x128xf32>
    %15 = arith.addf %14, %13 : vector<8x128xf32>
    %16 = arith.divf %14, %15 : vector<8x128xf32>
    %17 = arith.truncf %16 : vector<8x128xf32> to vector<8x128xbf16>
    %c0_8 = arith.constant 0 : index
    %c0_9 = arith.constant 0 : index
    %18 = vector.load %arg4[%c0_8, %c0_9] : memref<8x128xbf16, #tpu.memory_space<vmem>>, vector<8x128xbf16>
    tpu.vector_store %arg4[%c0_8, %c0_9], %17 {strides = array<i32>} : memref<8x128xbf16, #tpu.memory_space<vmem>>, vector<8x128xbf16>,
    return
  }
  func.func @transform_0(%arg0: i32) -> (i32, i32) {
    %c0_i32 = arith.constant 0 : i32
    %c0_i32_0 = arith.constant 0 : i32
    return %arg0, %c0_i32 : i32, i32
  }
  func.func @transform_1(%arg0: i32) -> (i32, i32) {
    %c0_i32 = arith.constant 0 : i32
    %c0_i32_0 = arith.constant 0 : i32
    %c0_i32_1 = arith.constant 0 : i32
    return %c0_i32, %c0_i32_0 : i32, i32
  }
  func.func @transform_2(%arg0: i32) -> (i32, i32) {
    %c0_i32 = arith.constant 0 : i32
    %c0_i32_0 = arith.constant 0 : i32
    %c0_i32_1 = arith.constant 0 : i32
    return %c0_i32, %c0_i32_0 : i32, i32
  }
  func.func @transform_3(%arg0: i32) -> (i32, i32) {
    %c0_i32 = arith.constant 0 : i32
    %c0_i32_0 = arith.constant 0 : i32
    return %arg0, %c0_i32 : i32, i32
  }
}

</mosaic_0001>

<llo_original>
// kernel: tpu_custom_call.1
$region0: #{tpu_custom_call.1}
  #allocation0 [shape = 'u32[]', space=smem, size = 0x4, offset = 0x4, fixed_abs, tag = 'smem constant byte address 0x4 - core index']
  #allocation1 [shape = 'u32[72,128]{1,0:T(1,128)}', space=vmem, size = 0x9000, scoped, tag = 'internal scratch']
  %s0 = inlined_call_operand.hbm [shape: f32[8,16], index: 0, kind: input, shape index: {}]
  %s1 = inlined_call_operand.hbm [shape: bf16[16,128], index: 1, kind: input, shape index: {}]
  %s2 = inlined_call_operand.hbm [shape: bf16[128,128], index: 2, kind: input, shape index: {}]
  %s3 = inlined_call_operand.hbm [shape: bf16[8,128], index: 3, kind: output, shape index: {}]
  %s4 = sld [smem:[#allocation0]]
  $region34: #{tpu_custom_call.1} parent=0
    _
  %s6 = ssub.s32 1, %s4
  %s7 = scalar_select 0, %s6, %s4
  $region1: #{tpu_custom_call.1} parent=0
    #allocation2 [shape = 'u8[4096]{0}', space=vmem, size = 0x1000, scoped, tag = 'input window, operand 0, single buffered']
    #allocation3 [shape = 's32[1]{0}', space=sflag, size = 0x4, scoped, tag = 'scoped memory for tpu_custom_call.1']
    #allocation4 [shape = 's32[1]{0}', space=sflag, size = 0x4, scoped, tag = 'scoped memory for tpu_custom_call.1']
    #allocation5 [shape = 'u8[4096]{0}', space=vmem, size = 0x1000, scoped, tag = 'input window, operand 1, single buffered']
    #allocation6 [shape = 's32[1]{0}', space=sflag, size = 0x4, scoped, tag = 'scoped memory for tpu_custom_call.1']
    #allocation7 [shape = 'u8[32768]{0}', space=vmem, size = 0x8000, scoped, tag = 'input window, operand 2, single buffered']
    #allocation8 [shape = 'u8[2048]{0}', space=vmem, size = 0x800, scoped, tag = 'output window, operand 0, single buffered']
    %8 = vsyncpa [#allocation3], 0
    %9 = vsyncpa [#allocation6], 0
    %10 = vsyncpa [#allocation4], 0
    // Predicated region
    $region2: #{tpu_custom_call.1} parent=1 // pred_check
      _
    $region3: #{tpu_custom_call.1} parent=1 // pred_check_branch
      %12 = sbr.rel (0) target = $region5
    $region4: #{tpu_custom_call.1} parent=1 // pred_region
      %14 = vsyncadd [#allocation3], 0
      %s16 = sshll.u32 %s0, 4
      %s17 = int_to_ptr.hbm [resolvable:$true] %s16
      %s18 = sshll.u32 [#allocation2], 4
      %s19 = int_to_ptr.vmem [resolvable:$true] %s18
      %21 = dma.hbm_to_vmem [thread:$0]  %s17, 128, %s19, [#allocation3]
    $region5: #{tpu_custom_call.1} parent=1 // pred_fallthru
      _
    // Predicated region
    $region6: #{tpu_custom_call.1} parent=1 // pred_check
      _
    $region7: #{tpu_custom_call.1} parent=1 // pred_check_branch
      %23 = sbr.rel (0) target = $region9
    $region8: #{tpu_custom_call.1} parent=1 // pred_region
      %25 = vsyncadd [#allocation6], 0
      %s26 = sshll.u32 %s1, 4
      %s27 = int_to_ptr.hbm [resolvable:$true] %s26
      %s28 = sshll.u32 [#allocation5], 4
      %s29 = int_to_ptr.vmem [resolvable:$true] %s28
      %34 = dma.hbm_to_vmem [thread:$0]  %s27, 128, %s29, [#allocation6], 64, 64, 4
    $region9: #{tpu_custom_call.1} parent=1 // pred_fallthru
      _
    // Predicated region
    $region10: #{tpu_custom_call.1} parent=1 // pred_check
      _
    $region11: #{tpu_custom_call.1} parent=1 // pred_check_branch
      %36 = sbr.rel (0) target = $region13
    $region12: #{tpu_custom_call.1} parent=1 // pred_region
      %38 = vsyncadd [#allocation6], 0
      %s39 = sshll.u32 %s2, 4
      %s40 = int_to_ptr.hbm [resolvable:$true] %s39
      %s41 = sshll.u32 [#allocation7], 4
      %s42 = int_to_ptr.vmem [resolvable:$true] %s41
      %47 = dma.hbm_to_vmem [thread:$0]  %s40, 1024, %s42, [#allocation6], 64, 64, 4
    $region13: #{tpu_custom_call.1} parent=1 // pred_fallthru
      _
    // Predicated region
    $region14: #{tpu_custom_call.1} parent=1 // pred_check
      _
    $region15: #{tpu_custom_call.1} parent=1 // pred_check_branch
      %49 = sbr.rel (0) target = $region17
    $region16: #{tpu_custom_call.1} parent=1 // pred_region
      %51 = dma.done [#allocation3], 128
    $region17: #{tpu_custom_call.1} parent=1 // pred_fallthru
      _
    // Predicated region
    $region18: #{tpu_custom_call.1} parent=1 // pred_check
      _
    $region19: #{tpu_custom_call.1} parent=1 // pred_check_branch
      %53 = sbr.rel (0) target = $region21
    $region20: #{tpu_custom_call.1} parent=1 // pred_region
      %55 = dma.done [#allocation6], 128
    $region21: #{tpu_custom_call.1} parent=1 // pred_fallthru
      _
    // Predicated region
    $region22: #{tpu_custom_call.1} parent=1 // pred_check
      _
    $region23: #{tpu_custom_call.1} parent=1 // pred_check_branch
      %57 = sbr.rel (0) target = $region25
    $region24: #{tpu_custom_call.1} parent=1 // pred_region
      %59 = dma.done [#allocation6], 1024
    $region25: #{tpu_custom_call.1} parent=1 // pred_fallthru
      _
    %v61 = vld [vmem:[#allocation2] sm:$0xff]
    %v62 = vpack.c.bf16 %v61, %v61
    %v63 = vld [vmem:[#allocation5] sm:$0xf]
    %v64 = vld [vmem:[#allocation5 + $0x4] sm:$0xf]
    %v67 = vunpack.c.l.b16 %v63
    %v68 = vunpack.c.l.b16 %v64
    %v69 = vpack.c.b16 %v68, %v67
    %vm71 = vcmask 130048
    %v73 = vsel %vm71, %v62, 0
    %75 = vmatpush.bf16.msra.mxu0 0
    %76 = vmatpush.bf16.msra.mxu0 0
    %77 = vmatpush.bf16.msra.mxu0 0
    %78 = vmatpush.bf16.msra.mxu0 0
    %79 = vmatpush.bf16.msra.mxu0 0
    %80 = vmatpush.bf16.msra.mxu0 0
    %81 = vmatpush.bf16.msra.mxu0 0
    %82 = vmatpush.bf16.msra.mxu0 %v69
    %83 = vmatmul.bf16.gmra.mxu0 %v73
    %v84 = vpop.f32.mrf.mxu0
    %v85 = vadd.f32 0.0, %v84
    %v86 = vpop.f32.mrf.mxu0
    %87 = vdwg.mxu0
    %v88 = vxor.u32 %v85, 2147483648
    %v89 = vmul.f32 %v88, 1.442695
    %v90 = vpow.pop %v89
    %v91 = vadd.f32 %v90, 1.0
    %v92 = vrcp.pop %v91
    %v93 = vmul.f32 %v91, %v92
    %v94 = vsub.f32 1.0, %v93
    %v95 = vmul.f32 %v92, %v94
    %v96 = vadd.f32 %v92, %v95
    %vm97 = vweird.f32 %v91
    %vm98 = vweird.f32 %v92
    %vm99 = vmor %vm97, %vm98
    %v100 = vsel %vm99, %v92, %v96
    %v101 = vand.u32 2147483647, %v91
    %vm102 = vcmp.eq.f32.partialorder %v101, 8.507059e+37
    %v103 = vand.u32 %v91, 2147483648
    %v104 = vor.u32 1.1754944e-38, %v103
    %v105 = vsel %vm102, %v104, %v100
    %v106 = vmul.f32 1.0, %v105
    %v107 = vpack.c.bf16 %v106, %v106
    %v108 = vld [vmem:[#allocation7] sm:$0xf]
    %v109 = vld [vmem:[#allocation7 + $0x4] sm:$0xf]
    %v110 = vld [vmem:[#allocation7 + $0x8] sm:$0xf]
    %v111 = vld [vmem:[#allocation7 + $0xc] sm:$0xf]
    %v112 = vld [vmem:[#allocation7 + $0x10] sm:$0xf]
    %v113 = vld [vmem:[#allocation7 + $0x14] sm:$0xf]
    %v114 = vld [vmem:[#allocation7 + $0x18] sm:$0xf]
    %v115 = vld [vmem:[#allocation7 + $0x1c] sm:$0xf]
    %v116 = vld [vmem:[#allocation7 + $0x20] sm:$0xf]
    %v117 = vld [vmem:[#allocation7 + $0x24] sm:$0xf]
    %v118 = vld [vmem:[#allocation7 + $0x28] sm:$0xf]
    %v119 = vld [vmem:[#allocation7 + $0x2c] sm:$0xf]
    %v120 = vld [vmem:[#allocation7 + $0x30] sm:$0xf]
    %v121 = vld [vmem:[#allocation7 + $0x34] sm:$0xf]
    %v122 = vld [vmem:[#allocation7 + $0x38] sm:$0xf]
    %v123 = vld [vmem:[#allocation7 + $0x3c] sm:$0xf]
    %v140 = vunpack.c.l.b16 %v108
    %v141 = vunpack.c.l.b16 %v109
    %v142 = vunpack.c.l.b16 %v110
    %v143 = vunpack.c.l.b16 %v111
    %v144 = vunpack.c.l.b16 %v112
    %v145 = vunpack.c.l.b16 %v113
    %v146 = vunpack.c.l.b16 %v114
    %v147 = vunpack.c.l.b16 %v115
    %v148 = vunpack.c.l.b16 %v116
    %v149 = vunpack.c.l.b16 %v117
    %v150 = vunpack.c.l.b16 %v118
    %v151 = vunpack.c.l.b16 %v119
    %v152 = vunpack.c.l.b16 %v120
    %v153 = vunpack.c.l.b16 %v121
    %v154 = vunpack.c.l.b16 %v122
    %v155 = vunpack.c.l.b16 %v123
    %v156 = vpack.c.b16 %v141, %v140
    %v157 = vpack.c.b16 %v143, %v142
    %v158 = vpack.c.b16 %v145, %v144
    %v159 = vpack.c.b16 %v147, %v146
    %v160 = vpack.c.b16 %v149, %v148
    %v161 = vpack.c.b16 %v151, %v150
    %v162 = vpack.c.b16 %v153, %v152
    %v163 = vpack.c.b16 %v155, %v154
    %172 = vmatpush.bf16.msra.mxu0 %v163
    %173 = vmatpush.bf16.msra.mxu0 %v162
    %174 = vmatpush.bf16.msra.mxu0 %v161
    %175 = vmatpush.bf16.msra.mxu0 %v160
    %176 = vmatpush.bf16.msra.mxu0 %v159
    %177 = vmatpush.bf16.msra.mxu0 %v158
    %178 = vmatpush.bf16.msra.mxu0 %v157
    %179 = vmatpush.bf16.msra.mxu0 %v156
    %180 = vmatmul.bf16.gmra.mxu0 %v107
    %v181 = vpop.f32.mrf.mxu0
    %v182 = vadd.f32 0.0, %v181
    %v183 = vpop.f32.mrf.mxu0
    %184 = vdwg.mxu0
    %v185 = vxor.u32 %v182, 2147483648
    %v186 = vmul.f32 %v185, 1.442695
    %v187 = vpow.pop %v186
    %v188 = vadd.f32 %v187, 1.0
    %v189 = vrcp.pop %v188
    %v190 = vmul.f32 %v188, %v189
    %v191 = vsub.f32 1.0, %v190
    %v192 = vmul.f32 %v189, %v191
    %v193 = vadd.f32 %v189, %v192
    %vm194 = vweird.f32 %v188
    %vm195 = vweird.f32 %v189
    %vm196 = vmor %vm194, %vm195
    %v197 = vsel %vm196, %v189, %v193
    %v198 = vand.u32 2147483647, %v188
    %vm199 = vcmp.eq.f32.partialorder %v198, 8.507059e+37
    %v200 = vand.u32 %v188, 2147483648
    %v201 = vor.u32 1.1754944e-38, %v200
    %v202 = vsel %vm199, %v201, %v197
    %v203 = vmul.f32 1.0, %v202
    %v204 = vpack.c.bf16 %v203, %v203
    %205 = vst [vmem:[#allocation8] sm:$0xf] %v204
    // Predicated region
    $region26: #{tpu_custom_call.1} parent=1 // pred_check
      _
    $region27: #{tpu_custom_call.1} parent=1 // pred_check_branch
      %207 = sbr.rel (0) target = $region29
    $region28: #{tpu_custom_call.1} parent=1 // pred_region
      %209 = vsyncadd [#allocation4], 0
      %s211 = sshll.u32 [#allocation8], 4
      %s212 = int_to_ptr.vmem [resolvable:$true] %s211
      %s213 = sshll.u32 %s3, 4
      %s214 = int_to_ptr.hbm [resolvable:$true] %s213
      %216 = dma.vmem_to_hbm [thread:$0]  %s212, 64, %s214, [#allocation4]
    $region29: #{tpu_custom_call.1} parent=1 // pred_fallthru
      _
    // Predicated region
    $region30: #{tpu_custom_call.1} parent=1 // pred_check
      _
    $region31: #{tpu_custom_call.1} parent=1 // pred_check_branch
      %218 = sbr.rel (0) target = $region33
    $region32: #{tpu_custom_call.1} parent=1 // pred_region
      %220 = dma.done [#allocation4], 64
    $region33: #{tpu_custom_call.1} parent=1 // pred_fallthru
      _
    %221 = vsyncpa [#allocation3], 1
    %222 = vsyncpa [#allocation6], 1
    %223 = vsyncpa [#allocation4], 1

// kernel: tpu_custom_call.1
$region0: #{tpu_custom_call.1}
  #allocation0 [shape = 'u32[]', space=smem, size = 0x4, offset = 0x4, fixed_abs, tag = 'smem constant byte address 0x4 - core index']
  #allocation1 [shape = 'u32[72,128]{1,0:T(1,128)}', space=vmem, size = 0x9000, scoped, tag = 'internal scratch']
  %s0 = inlined_call_operand.hbm [shape: f32[8,16], index: 0, kind: input, shape index: {}]
  %s1 = inlined_call_operand.hbm [shape: bf16[16,128], index: 1, kind: input, shape index: {}]
  %s2 = inlined_call_operand.hbm [shape: bf16[128,128], index: 2, kind: input, shape index: {}]
  %s3 = inlined_call_operand.hbm [shape: bf16[8,128], index: 3, kind: output, shape index: {}]
  %s4 = sld [smem:[#allocation0]]
  $region34: #{tpu_custom_call.1} parent=0
    _
  %s6 = ssub.s32 1, %s4
  %s7 = scalar_select 0, %s6, %s4
  $region1: #{tpu_custom_call.1} parent=0
    #allocation2 [shape = 'u8[4096]{0}', space=vmem, size = 0x1000, scoped, tag = 'input window, operand 0, single buffered']
    #allocation3 [shape = 's32[1]{0}', space=sflag, size = 0x4, scoped, tag = 'scoped memory for tpu_custom_call.1']
    #allocation4 [shape = 's32[1]{0}', space=sflag, size = 0x4, scoped, tag = 'scoped memory for tpu_custom_call.1']
    #allocation5 [shape = 'u8[4096]{0}', space=vmem, size = 0x1000, scoped, tag = 'input window, operand 1, single buffered']
    #allocation6 [shape = 's32[1]{0}', space=sflag, size = 0x4, scoped, tag = 'scoped memory for tpu_custom_call.1']
    #allocation7 [shape = 'u8[32768]{0}', space=vmem, size = 0x8000, scoped, tag = 'input window, operand 2, single buffered']
    #allocation8 [shape = 'u8[2048]{0}', space=vmem, size = 0x800, scoped, tag = 'output window, operand 0, single buffered']
    %8 = vsyncpa [#allocation3], 0
    %9 = vsyncpa [#allocation6], 0
    %10 = vsyncpa [#allocation4], 0
    // Predicated region
    $region2: #{tpu_custom_call.1} parent=1 // pred_check
      _
    $region3: #{tpu_custom_call.1} parent=1 // pred_check_branch
      %12 = sbr.rel (0) target = $region5
    $region4: #{tpu_custom_call.1} parent=1 // pred_region
      %14 = vsyncadd [#allocation3], 0
      %s16 = sshll.u32 %s0, 4
      %s17 = int_to_ptr.hbm [resolvable:$true] %s16
      %s18 = sshll.u32 [#allocation2], 4
      %s19 = int_to_ptr.vmem [resolvable:$true] %s18
      %21 = dma.hbm_to_vmem [thread:$0]  %s17, 128, %s19, [#allocation3]
    $region5: #{tpu_custom_call.1} parent=1 // pred_fallthru
      _
    // Predicated region
    $region6: #{tpu_custom_call.1} parent=1 // pred_check
      _
    $region7: #{tpu_custom_call.1} parent=1 // pred_check_branch
      %23 = sbr.rel (0) target = $region9
    $region8: #{tpu_custom_call.1} parent=1 // pred_region
      %25 = vsyncadd [#allocation6], 0
      %s26 = sshll.u32 %s1, 4
      %s27 = int_to_ptr.hbm [resolvable:$true] %s26
      %s28 = sshll.u32 [#allocation5], 4
      %s29 = int_to_ptr.vmem [resolvable:$true] %s28
      %34 = dma.hbm_to_vmem [thread:$0]  %s27, 128, %s29, [#allocation6], 64, 64, 4
    $region9: #{tpu_custom_call.1} parent=1 // pred_fallthru
      _
    // Predicated region
    $region10: #{tpu_custom_call.1} parent=1 // pred_check
      _
    $region11: #{tpu_custom_call.1} parent=1 // pred_check_branch
      %36 = sbr.rel (0) target = $region13
    $region12: #{tpu_custom_call.1} parent=1 // pred_region
      %38 = vsyncadd [#allocation6], 0
      %s39 = sshll.u32 %s2, 4
      %s40 = int_to_ptr.hbm [resolvable:$true] %s39
      %s41 = sshll.u32 [#allocation7], 4
      %s42 = int_to_ptr.vmem [resolvable:$true] %s41
      %47 = dma.hbm_to_vmem [thread:$0]  %s40, 1024, %s42, [#allocation6], 64, 64, 4
    $region13: #{tpu_custom_call.1} parent=1 // pred_fallthru
      _
    // Predicated region
    $region14: #{tpu_custom_call.1} parent=1 // pred_check
      _
    $region15: #{tpu_custom_call.1} parent=1 // pred_check_branch
      %49 = sbr.rel (0) target = $region17
    $region16: #{tpu_custom_call.1} parent=1 // pred_region
      %51 = dma.done [#allocation3], 128
    $region17: #{tpu_custom_call.1} parent=1 // pred_fallthru
      _
    // Predicated region
    $region18: #{tpu_custom_call.1} parent=1 // pred_check
      _
    $region19: #{tpu_custom_call.1} parent=1 // pred_check_branch
      %53 = sbr.rel (0) target = $region21
    $region20: #{tpu_custom_call.1} parent=1 // pred_region
      %55 = dma.done [#allocation6], 128
    $region21: #{tpu_custom_call.1} parent=1 // pred_fallthru
      _
    // Predicated region
    $region22: #{tpu_custom_call.1} parent=1 // pred_check
      _
    $region23: #{tpu_custom_call.1} parent=1 // pred_check_branch
      %57 = sbr.rel (0) target = $region25
    $region24: #{tpu_custom_call.1} parent=1 // pred_region
      %59 = dma.done [#allocation6], 1024
    $region25: #{tpu_custom_call.1} parent=1 // pred_fallthru
      _
    %v61 = vld [vmem:[#allocation2] sm:$0xff]
    %v62 = vpack.c.bf16 %v61, %v61
    %v63 = vld [vmem:[#allocation5] sm:$0xf]
    %v64 = vld [vmem:[#allocation5 + $0x4] sm:$0xf]
    %v67 = vunpack.c.l.b16 %v63
    %v68 = vunpack.c.l.b16 %v64
    %v69 = vpack.c.b16 %v68, %v67
    %vm71 = vcmask 130048
    %v73 = vsel %vm71, %v62, 0
    %75 = vmatpush.bf16.msra.mxu0 0
    %76 = vmatpush.bf16.msra.mxu0 0
    %77 = vmatpush.bf16.msra.mxu0 0
    %78 = vmatpush.bf16.msra.mxu0 0
    %79 = vmatpush.bf16.msra.mxu0 0
    %80 = vmatpush.bf16.msra.mxu0 0
    %81 = vmatpush.bf16.msra.mxu0 0
    %82 = vmatpush.bf16.msra.mxu0 %v69
    %83 = vmatmul.bf16.gmra.mxu0 %v73
    %v84 = vpop.f32.mrf.mxu0
    %v85 = vadd.f32 0.0, %v84
    %v86 = vpop.f32.mrf.mxu0
    %87 = vdwg.mxu0
    %v88 = vxor.u32 %v85, 2147483648
    %v89 = vmul.f32 %v88, 1.442695
    %v90 = vpow.pop %v89
    %v91 = vadd.f32 %v90, 1.0
    %v92 = vrcp.pop %v91
    %v93 = vmul.f32 %v91, %v92
    %v94 = vsub.f32 1.0, %v93
    %v95 = vmul.f32 %v92, %v94
    %v96 = vadd.f32 %v92, %v95
    %vm97 = vweird.f32 %v91
    %vm98 = vweird.f32 %v92
    %vm99 = vmor %vm97, %vm98
    %v100 = vsel %vm99, %v92, %v96
    %v101 = vand.u32 2147483647, %v91
    %vm102 = vcmp.eq.f32.partialorder %v101, 8.507059e+37
    %v103 = vand.u32 %v91, 2147483648
    %v104 = vor.u32 1.1754944e-38, %v103
    %v105 = vsel %vm102, %v104, %v100
    %v106 = vmul.f32 1.0, %v105
    %v107 = vpack.c.bf16 %v106, %v106
    %v108 = vld [vmem:[#allocation7] sm:$0xf]
    %v109 = vld [vmem:[#allocation7 + $0x4] sm:$0xf]
    %v110 = vld [vmem:[#allocation7 + $0x8] sm:$0xf]
    %v111 = vld [vmem:[#allocation7 + $0xc] sm:$0xf]
    %v112 = vld [vmem:[#allocation7 + $0x10] sm:$0xf]
    %v113 = vld [vmem:[#allocation7 + $0x14] sm:$0xf]
    %v114 = vld [vmem:[#allocation7 + $0x18] sm:$0xf]
    %v115 = vld [vmem:[#allocation7 + $0x1c] sm:$0xf]
    %v116 = vld [vmem:[#allocation7 + $0x20] sm:$0xf]
    %v117 = vld [vmem:[#allocation7 + $0x24] sm:$0xf]
    %v118 = vld [vmem:[#allocation7 + $0x28] sm:$0xf]
    %v119 = vld [vmem:[#allocation7 + $0x2c] sm:$0xf]
    %v120 = vld [vmem:[#allocation7 + $0x30] sm:$0xf]
    %v121 = vld [vmem:[#allocation7 + $0x34] sm:$0xf]
    %v122 = vld [vmem:[#allocation7 + $0x38] sm:$0xf]
    %v123 = vld [vmem:[#allocation7 + $0x3c] sm:$0xf]
    %v140 = vunpack.c.l.b16 %v108
    %v141 = vunpack.c.l.b16 %v109
    %v142 = vunpack.c.l.b16 %v110
    %v143 = vunpack.c.l.b16 %v111
    %v144 = vunpack.c.l.b16 %v112
    %v145 = vunpack.c.l.b16 %v113
    %v146 = vunpack.c.l.b16 %v114
    %v147 = vunpack.c.l.b16 %v115
    %v148 = vunpack.c.l.b16 %v116
    %v149 = vunpack.c.l.b16 %v117
    %v150 = vunpack.c.l.b16 %v118
    %v151 = vunpack.c.l.b16 %v119
    %v152 = vunpack.c.l.b16 %v120
    %v153 = vunpack.c.l.b16 %v121
    %v154 = vunpack.c.l.b16 %v122
    %v155 = vunpack.c.l.b16 %v123
    %v156 = vpack.c.b16 %v141, %v140
    %v157 = vpack.c.b16 %v143, %v142
    %v158 = vpack.c.b16 %v145, %v144
    %v159 = vpack.c.b16 %v147, %v146
    %v160 = vpack.c.b16 %v149, %v148
    %v161 = vpack.c.b16 %v151, %v150
    %v162 = vpack.c.b16 %v153, %v152
    %v163 = vpack.c.b16 %v155, %v154
    %172 = vmatpush.bf16.msra.mxu0 %v163
    %173 = vmatpush.bf16.msra.mxu0 %v162
    %174 = vmatpush.bf16.msra.mxu0 %v161
    %175 = vmatpush.bf16.msra.mxu0 %v160
    %176 = vmatpush.bf16.msra.mxu0 %v159
    %177 = vmatpush.bf16.msra.mxu0 %v158
    %178 = vmatpush.bf16.msra.mxu0 %v157
    %179 = vmatpush.bf16.msra.mxu0 %v156
    %180 = vmatmul.bf16.gmra.mxu0 %v107
    %v181 = vpop.f32.mrf.mxu0
    %v182 = vadd.f32 0.0, %v181
    %v183 = vpop.f32.mrf.mxu0
    %184 = vdwg.mxu0
    %v185 = vxor.u32 %v182, 2147483648
    %v186 = vmul.f32 %v185, 1.442695
    %v187 = vpow.pop %v186
    %v188 = vadd.f32 %v187, 1.0
    %v189 = vrcp.pop %v188
    %v190 = vmul.f32 %v188, %v189
    %v191 = vsub.f32 1.0, %v190
    %v192 = vmul.f32 %v189, %v191
    %v193 = vadd.f32 %v189, %v192
    %vm194 = vweird.f32 %v188
    %vm195 = vweird.f32 %v189
    %vm196 = vmor %vm194, %vm195
    %v197 = vsel %vm196, %v189, %v193
    %v198 = vand.u32 2147483647, %v188
    %vm199 = vcmp.eq.f32.partialorder %v198, 8.507059e+37
    %v200 = vand.u32 %v188, 2147483648
    %v201 = vor.u32 1.1754944e-38, %v200
    %v202 = vsel %vm199, %v201, %v197
    %v203 = vmul.f32 1.0, %v202
    %v204 = vpack.c.bf16 %v203, %v203
    %205 = vst [vmem:[#allocation8] sm:$0xf] %v204
    // Predicated region
    $region26: #{tpu_custom_call.1} parent=1 // pred_check
      _
    $region27: #{tpu_custom_call.1} parent=1 // pred_check_branch
      %207 = sbr.rel (0) target = $region29
    $region28: #{tpu_custom_call.1} parent=1 // pred_region
      %209 = vsyncadd [#allocation4], 0
      %s211 = sshll.u32 [#allocation8], 4
      %s212 = int_to_ptr.vmem [resolvable:$true] %s211
      %s213 = sshll.u32 %s3, 4
      %s214 = int_to_ptr.hbm [resolvable:$true] %s213
      %216 = dma.vmem_to_hbm [thread:$0]  %s212, 64, %s214, [#allocation4]
    $region29: #{tpu_custom_call.1} parent=1 // pred_fallthru
      _
    // Predicated region
    $region30: #{tpu_custom_call.1} parent=1 // pred_check
      _
    $region31: #{tpu_custom_call.1} parent=1 // pred_check_branch
      %218 = sbr.rel (0) target = $region33
    $region32: #{tpu_custom_call.1} parent=1 // pred_region
      %220 = dma.done [#allocation4], 64
    $region33: #{tpu_custom_call.1} parent=1 // pred_fallthru
      _
    %221 = vsyncpa [#allocation3], 1
    %222 = vsyncpa [#allocation6], 1
    %223 = vsyncpa [#allocation4], 1

</llo_original>
